<compile_context>
chip_gen: v5e
topology: v5e:2x2
jax: 0.10.0
libtpu: 0.0.40
codegen_flags: <defaults>
</compile_context>

<pallas_src>
import jax
import jax.numpy as jnp
import numpy as np
from jax.experimental import pallas as pl
from jax.experimental.pallas import tpu as pltpu

D_MLP = 20
SAE_DIM = 40


# --------------------------------------------------------------------------- #
# Kernels (feature-major: batch on lanes; weights/biases resident in VMEM)
# --------------------------------------------------------------------------- #
def _sae_kernel_out_only(hT_ref, w_enc_ref, w_dec_ref, b_enc_ref, b_dec_ref,
                         outT_ref):
    # hT_ref:  (d_mlp, tb)      io dtype (bf16 or f32)
    # w_enc:   (sae_dim, d_mlp) io-matched dtype for a single MXU pass
    # w_dec:   (d_mlp, sae_dim) f32
    # b_enc:   (sae_dim, 1)     f32  (already has -W_enc @ b_dec folded in)
    # b_dec:   (d_mlp, 1)       f32
    pre = jnp.dot(w_enc_ref[...], hT_ref[...],
                  preferred_element_type=jnp.float32) + b_enc_ref[...]
    inter = jnp.maximum(pre, 0.0)                                  # (sae_dim, tb)
    out = jnp.dot(w_dec_ref[...], inter,
                  preferred_element_type=jnp.float32) + b_dec_ref[...]
    outT_ref[...] = out.astype(outT_ref.dtype)                     # (d_mlp, tb)


def _sae_kernel_combined(hT_ref, w_enc_ref, w_dec_ref, b_enc_ref, b_dec_ref,
                         combo_ref):
    # combo_ref: (d_mlp + sae_dim, tb); rows [:d_mlp]=out, rows [d_mlp:]=inter.
    d_mlp = w_dec_ref.shape[0]
    pre = jnp.dot(w_enc_ref[...], hT_ref[...],
                  preferred_element_type=jnp.float32) + b_enc_ref[...]
    inter = jnp.maximum(pre, 0.0)
    out = jnp.dot(w_dec_ref[...], inter,
                  preferred_element_type=jnp.float32) + b_dec_ref[...]
    combo_ref[:d_mlp, :] = out.astype(combo_ref.dtype)
    combo_ref[d_mlp:, :] = inter.astype(combo_ref.dtype)


# --------------------------------------------------------------------------- #
# Pallas call wrapper (feature-major core)
# --------------------------------------------------------------------------- #
def _pick_tile(B, block_b):
    """Lane tile: 128-aligned, capped at block_b, >=2 grid steps when B > 128
    so the "parallel" axis can shard across v7x's two TensorCores."""
    if B <= 128:
        return B                      # single full-extent block (grid = 1)
    tb = 128 * pl.cdiv(B, 256)        # ensures cdiv(B, tb) >= 2
    return int(min(block_b, tb))


def _sae_forward_featmajor(hT, W_enc, W_dec, b_enc, b_dec, *,
                           block_b, return_intermediate):
    d_mlp, B = hT.shape
    sae_dim = W_enc.shape[0]
    assert W_enc.shape == (sae_dim, d_mlp)
    assert W_dec.shape == (d_mlp, sae_dim)
    assert block_b >= 128 and block_b % 128 == 0, \
        "block_b must be a positive multiple of 128 (lanes)"

    io_dtype = hT.dtype

    # Fold the decoder-bias subtraction into the encoder bias:
    #   W_enc @ (h - b_dec) + b_enc  ==  W_enc @ h + (b_enc - W_enc @ b_dec)
    w_enc_f32 = jnp.asarray(W_enc, jnp.float32)
    b_enc_eff = (jnp.asarray(b_enc, jnp.float32)
                 - w_enc_f32 @ jnp.asarray(b_dec, jnp.float32)
                 ).reshape(sae_dim, 1)
    b_dec_c = jnp.asarray(b_dec, jnp.float32).reshape(d_mlp, 1)

    # bf16 activations -> bf16 encoder weights for one bf16 MXU pass (f32 acc);
    # otherwise keep everything f32. Decoder dot stays f32 (intermediate is f32).
    enc_dtype = jnp.bfloat16 if io_dtype == jnp.bfloat16 else jnp.float32
    w_enc_c = w_enc_f32.astype(enc_dtype)
    w_dec_c = jnp.asarray(W_dec, jnp.float32)

    tb = _pick_tile(B, block_b)
    grid = (pl.cdiv(B, tb),)          # ragged last block clipped by Pallas

    in_specs = [
        pl.BlockSpec((d_mlp, tb), lambda i: (0, i)),       # streamed activations
        pl.BlockSpec((sae_dim, d_mlp), lambda i: (0, 0)),  # resident weights
        pl.BlockSpec((d_mlp, sae_dim), lambda i: (0, 0)),  # resident weights
        pl.BlockSpec((sae_dim, 1), lambda i: (0, 0)),      # resident bias (enc, folded)
        pl.BlockSpec((d_mlp, 1), lambda i: (0, 0)),        # resident bias (dec)
    ]

    if return_intermediate:
        kernel = _sae_kernel_combined
        out_rows = d_mlp + sae_dim
    else:
        kernel = _sae_kernel_out_only
        out_rows = d_mlp
    out_shape = jax.ShapeDtypeStruct((out_rows, B), io_dtype)
    out_specs = pl.BlockSpec((out_rows, tb), lambda i: (0, i))

    itemsize = jnp.dtype(io_dtype).itemsize
    cost = pl.CostEstimate(
        flops=int(4 * B * d_mlp * sae_dim + B * (2 * sae_dim + d_mlp)),
        transcendentals=0,
        bytes_accessed=int(itemsize * B * (d_mlp + out_rows)
                           + 4 * (2 * d_mlp * sae_dim + sae_dim + d_mlp)),
    )

    return pl.pallas_call(
        kernel,
        out_shape=out_shape,
        grid_spec=pltpu.PrefetchScalarGridSpec(
            num_scalar_prefetch=0,
            grid=grid,
            in_specs=in_specs,
            out_specs=out_specs,
        ),
        compiler_params=pltpu.CompilerParams(
            dimension_semantics=("parallel",),  # megacore / 2-TC sharding
            # NOTE: no vmem_limit_bytes override — per-step footprint is a few
            # MiB even at block_b=4096..8192, well within the default scoped
            # VMEM on v5e/v6e/v7x.
        ),
        cost_estimate=cost,
    )(jnp.asarray(hT, io_dtype), w_enc_c, w_dec_c, b_enc_eff, b_dec_c)


# --------------------------------------------------------------------------- #
# Public APIs
# --------------------------------------------------------------------------- #
def autoencoder_forward_feature_major(hT, W_enc, W_dec, b_enc, b_dec, *,
                                      block_b=4096, return_intermediate=True):
    """Recommended (fast) entry point: activations kept feature-major.

    Args:
      hT: [d_mlp, B] activations (f32 or bf16 — bf16 halves HBM traffic).
    Returns:
      outT [d_mlp, B] (and interT [sae_dim, B] if return_intermediate).
      Consumers able to consume the raw concatenated [d_mlp+sae_dim, B] slab
      should call `_sae_forward_featmajor` directly to skip the split below.
    """
    d_mlp = hT.shape[0]
    res = _sae_forward_featmajor(hT, W_enc, W_dec, b_enc, b_dec,
                                 block_b=block_b,
                                 return_intermediate=return_intermediate)
    if return_intermediate:
        return res[:d_mlp, :], res[d_mlp:, :]
    return res


def autoencoder_forward(h, W_enc, W_dec, b_enc, b_dec, *,
                        block_b=4096, return_intermediate=True, io_dtype=None):
    """Drop-in batch-major wrapper matching the PyTorch module.

    NOTE: the transposes here are full HBM passes performed by XLA outside the
    kernel. Bandwidth-sensitive callers should keep activations feature-major
    end-to-end and use `autoencoder_forward_feature_major` instead.
    """
    io_dtype = h.dtype if io_dtype is None else io_dtype
    hT = jnp.asarray(h, io_dtype).T                       # (d_mlp, B)
    d_mlp = hT.shape[0]
    res = _sae_forward_featmajor(hT, W_enc, W_dec, b_enc, b_dec,
                                 block_b=block_b,
                                 return_intermediate=return_intermediate)
    if return_intermediate:
        return res[:d_mlp, :].T, res[d_mlp:, :].T
    return res.T


# --------------------------------------------------------------------------- #
# Reference / test harness
# --------------------------------------------------------------------------- #
def _xavier_uniform(key, shape, gain):
    fan_out, fan_in = shape
    bound = gain * np.sqrt(6.0 / (fan_in + fan_out))
    return jax.random.uniform(key, shape, dtype=jnp.float32,
                              minval=-bound, maxval=bound)


def _ref_forward(h, W_enc, W_dec, b_enc, b_dec):
    inter = jnp.maximum((h - b_dec) @ W_enc.T + b_enc, 0.0)
    out = inter @ W_dec.T + b_dec
    return out, inter


if __name__ == "__main__":
    key = jax.random.PRNGKey(0)
    k_enc, k_dec, k_be, k_bd, k_h1, k_h2 = jax.random.split(key, 6)

    gain = float(np.sqrt(2.0))  # torch.nn.init.calculate_gain('relu')
    W_enc = _xavier_uniform(k_enc, (SAE_DIM, D_MLP), gain)
    W_dec = _xavier_uniform(k_dec, (D_MLP, SAE_DIM), gain)
    # Module inits biases to zero; use non-zero values so the bias (and the
    # folded-bias) path is actually exercised numerically.
    b_enc = 0.1 * jax.random.normal(k_be, (SAE_DIM,), dtype=jnp.float32)
    b_dec = 0.1 * jax.random.normal(k_bd, (D_MLP,), dtype=jnp.float32)

    # --- Test A: batch-major drop-in API, f32, both outputs, tight tol -------
    B1 = 8
    h1 = jax.random.normal(k_h1, (B1, D_MLP), dtype=jnp.float32)
    out1, inter1 = autoencoder_forward(h1, W_enc, W_dec, b_enc, b_dec)
    out1 = jax.block_until_ready(out1)
    inter1 = jax.block_until_ready(inter1)

    out1_ref, inter1_ref = _ref_forward(h1, W_enc, W_dec, b_enc, b_dec)
    assert out1.shape == (B1, D_MLP) and inter1.shape == (B1, SAE_DIM)
    np.testing.assert_allclose(np.asarray(inter1), np.asarray(inter1_ref),
                               rtol=1e-5, atol=1e-5)
    np.testing.assert_allclose(np.asarray(out1), np.asarray(out1_ref),
                               rtol=1e-5, atol=1e-5)

    # --- Test B: feature-major fast path, bf16 I/O, ragged batch (2 grid
    #             steps, clipped tail block), output only --------------------
    B2 = 384
    h2 = jax.random.normal(k_h2, (B2, D_MLP), dtype=jnp.float32)
    h2T_bf16 = h2.T.astype(jnp.bfloat16)                   # layout owned by caller
    out2T = autoencoder_forward_feature_major(
        h2T_bf16, W_enc, W_dec, b_enc, b_dec,
        block_b=4096, return_intermediate=False)
    out2T = jax.block_until_ready(out2T)

    out2_ref, _ = _ref_forward(h2, W_enc, W_dec, b_enc, b_dec)
    assert out2T.shape == (D_MLP, B2) and out2T.dtype == jnp.bfloat16
    np.testing.assert_allclose(np.asarray(out2T.T, dtype=np.float32),
                               np.asarray(out2_ref),
                               rtol=5e-2, atol=1e-1)

    print("KERNEL_OK")
</pallas_src>

<mosaic_0001>
module attributes {stable_mosaic.version = 11 : i64} {
  func.func @_sae_kernel_combined(%arg0: i32, %arg1: memref<20x8xf32, #tpu.memory_space<vmem>>, %arg2: memref<40x20xf32, #tpu.memory_space<vmem>>, %arg3: memref<20x40xf32, #tpu.memory_space<vmem>>, %arg4: memref<40x1xf32, #tpu.memory_space<vmem>>, %arg5: memref<20x1xf32, #tpu.memory_space<vmem>>, %arg6: memref<60x8xf32, #tpu.memory_space<vmem>>) attributes {dimension_semantics = [#tpu.dimension_semantics<parallel>], iteration_bounds = array<i64: 1>, scalar_prefetch = 0 : i64, scratch_operands = 0 : i64, tpu.core_type = #tpu.core_type<tc>, window_params = [{transform_indices = @transform_0, window_bounds = array<i64: 20, 8>}, {pipeline_mode = #tpu.pipeline_mode<synchronous>, transform_indices = @transform_1, window_bounds = array<i64: 40, 20>}, {pipeline_mode = #tpu.pipeline_mode<synchronous>, transform_indices = @transform_2, window_bounds = array<i64: 20, 40>}, {pipeline_mode = #tpu.pipeline_mode<synchronous>, transform_indices = @transform_3, window_bounds = array<i64: 40, 1>}, {pipeline_mode = #tpu.pipeline_mode<synchronous>, transform_indices = @transform_4, window_bounds = array<i64: 20, 1>}, {transform_indices = @transform_5, window_bounds = array<i64: 60, 8>}]} {
    %c0 = arith.constant 0 : index
    %c0_0 = arith.constant 0 : index
    %0 = vector.load %arg2[%c0, %c0_0] : memref<40x20xf32, #tpu.memory_space<vmem>>, vector<40x20xf32>
    %c0_1 = arith.constant 0 : index
    %c0_2 = arith.constant 0 : index
    %1 = vector.load %arg1[%c0_1, %c0_2] : memref<20x8xf32, #tpu.memory_space<vmem>>, vector<20x8xf32>
    %cst = arith.constant dense<0.000000e+00> : vector<40x8xf32>
    %2 = tpu.matmul %0, %1, %cst {dimension_numbers = #tpu.dot_dimension_numbers<[1], [0], [0], [1], [0, 0, 1, 1], [], []>} : vector<40x20xf32>, vector<20x8xf32>, vector<40x8xf32> -> vector<40x8xf32>
    %c0_3 = arith.constant 0 : index
    %c0_4 = arith.constant 0 : index
    %3 = vector.load %arg4[%c0_3, %c0_4] : memref<40x1xf32, #tpu.memory_space<vmem>>, vector<40x1xf32>
    %4 = vector.broadcast %3 : vector<40x1xf32> to vector<40x8xf32>
    %5 = arith.addf %2, %4 : vector<40x8xf32>
    %cst_5 = arith.constant 0.000000e+00 : f32
    %6 = vector.broadcast %cst_5 : f32 to vector<40x8xf32>
    %7 = arith.maximumf %5, %6 : vector<40x8xf32>
    %c0_6 = arith.constant 0 : index
    %c0_7 = arith.constant 0 : index
    %8 = vector.load %arg3[%c0_6, %c0_7] : memref<20x40xf32, #tpu.memory_space<vmem>>, vector<20x40xf32>
    %cst_8 = arith.constant dense<0.000000e+00> : vector<20x8xf32>
    %9 = tpu.matmul %8, %7, %cst_8 {dimension_numbers = #tpu.dot_dimension_numbers<[1], [0], [0], [1], [0, 0, 1, 1], [], []>} : vector<20x40xf32>, vector<40x8xf32>, vector<20x8xf32> -> vector<20x8xf32>
    %c0_9 = arith.constant 0 : index
    %c0_10 = arith.constant 0 : index
    %10 = vector.load %arg5[%c0_9, %c0_10] : memref<20x1xf32, #tpu.memory_space<vmem>>, vector<20x1xf32>
    %11 = vector.broadcast %10 : vector<20x1xf32> to vector<20x8xf32>
    %12 = arith.addf %9, %11 : vector<20x8xf32>
    %c0_11 = arith.constant 0 : index
    %c0_12 = arith.constant 0 : index
    %13 = vector.load %arg6[%c0_11, %c0_12] : memref<60x8xf32, #tpu.memory_space<vmem>>, vector<20x8xf32>
    tpu.vector_store %arg6[%c0_11, %c0_12], %12 {strides = array<i32>} : memref<60x8xf32, #tpu.memory_space<vmem>>, vector<20x8xf32>,
    %c20 = arith.constant 20 : index
    %c0_13 = arith.constant 0 : index
    %14 = vector.load %arg6[%c20, %c0_13] : memref<60x8xf32, #tpu.memory_space<vmem>>, vector<40x8xf32>
    tpu.vector_store %arg6[%c20, %c0_13], %7 {strides = array<i32>} : memref<60x8xf32, #tpu.memory_space<vmem>>, vector<40x8xf32>,
    return
  }
  func.func @transform_0(%arg0: i32) -> (i32, i32) {
    %c0_i32 = arith.constant 0 : i32
    %c0_i32_0 = arith.constant 0 : i32
    return %c0_i32, %arg0 : i32, i32
  }
  func.func @transform_1(%arg0: i32) -> (i32, i32) {
    %c0_i32 = arith.constant 0 : i32
    %c0_i32_0 = arith.constant 0 : i32
    %c0_i32_1 = arith.constant 0 : i32
    return %c0_i32, %c0_i32_0 : i32, i32
  }
  func.func @transform_2(%arg0: i32) -> (i32, i32) {
    %c0_i32 = arith.constant 0 : i32
    %c0_i32_0 = arith.constant 0 : i32
    %c0_i32_1 = arith.constant 0 : i32
    return %c0_i32, %c0_i32_0 : i32, i32
  }
  func.func @transform_3(%arg0: i32) -> (i32, i32) {
    %c0_i32 = arith.constant 0 : i32
    %c0_i32_0 = arith.constant 0 : i32
    %c0_i32_1 = arith.constant 0 : i32
    return %c0_i32, %c0_i32_0 : i32, i32
  }
  func.func @transform_4(%arg0: i32) -> (i32, i32) {
    %c0_i32 = arith.constant 0 : i32
    %c0_i32_0 = arith.constant 0 : i32
    %c0_i32_1 = arith.constant 0 : i32
    return %c0_i32, %c0_i32_0 : i32, i32
  }
  func.func @transform_5(%arg0: i32) -> (i32, i32) {
    %c0_i32 = arith.constant 0 : i32
    %c0_i32_0 = arith.constant 0 : i32
    return %c0_i32, %arg0 : i32, i32
  }
}

</mosaic_0001>

<llo_original>
// kernel: tpu_custom_call.1
$region0: #{tpu_custom_call.1}
  #allocation0 [shape = 'u32[]', space=smem, size = 0x4, offset = 0x4, fixed_abs, tag = 'smem constant byte address 0x4 - core index']
  #allocation1 [shape = 'u32[72,128]{1,0:T(1,128)}', space=vmem, size = 0x9000, scoped, tag = 'internal scratch']
  %s0 = inlined_call_operand.vmem [shape: f32[20,8], index: 0, kind: input, shape index: {}]
  %s1 = inlined_call_operand.vmem [shape: f32[40,20], index: 1, kind: input, shape index: {}]
  %s2 = inlined_call_operand.vmem [shape: f32[20,40], index: 2, kind: input, shape index: {}]
  %s3 = inlined_call_operand.vmem [shape: f32[40,1], index: 3, kind: input, shape index: {}]
  %s4 = inlined_call_operand.vmem [shape: f32[20,1], index: 4, kind: input, shape index: {}]
  %s5 = inlined_call_operand.vmem [shape: f32[60,8], index: 5, kind: output, shape index: {}]
  %s6 = sld [smem:[#allocation0]]
  $region30: #{tpu_custom_call.1} parent=0
    _
  %s8 = ssub.s32 1, %s6
  %s9 = scalar_select 0, %s8, %s6
  // Predicated region
  $region2: #{tpu_custom_call.1} parent=0 // pred_check
    _
  $region3: #{tpu_custom_call.1} parent=0 // pred_check_branch
    %11 = sbr.rel (0) target = $region5
  $region4: #{tpu_custom_call.1} parent=0 // pred_region
    _
  $region5: #{tpu_custom_call.1} parent=0 // pred_fallthru
    _
  // Predicated region
  $region6: #{tpu_custom_call.1} parent=0 // pred_check
    _
  $region7: #{tpu_custom_call.1} parent=0 // pred_check_branch
    %13 = sbr.rel (0) target = $region9
  $region8: #{tpu_custom_call.1} parent=0 // pred_region
    _
  $region9: #{tpu_custom_call.1} parent=0 // pred_fallthru
    _
  // Predicated region
  $region10: #{tpu_custom_call.1} parent=0 // pred_check
    _
  $region11: #{tpu_custom_call.1} parent=0 // pred_check_branch
    %15 = sbr.rel (0) target = $region13
  $region12: #{tpu_custom_call.1} parent=0 // pred_region
    _
  $region13: #{tpu_custom_call.1} parent=0 // pred_fallthru
    _
  // Predicated region
  $region14: #{tpu_custom_call.1} parent=0 // pred_check
    _
  $region15: #{tpu_custom_call.1} parent=0 // pred_check_branch
    %17 = sbr.rel (0) target = $region17
  $region16: #{tpu_custom_call.1} parent=0 // pred_region
    _
  $region17: #{tpu_custom_call.1} parent=0 // pred_fallthru
    _
  // Predicated region
  $region18: #{tpu_custom_call.1} parent=0 // pred_check
    _
  $region19: #{tpu_custom_call.1} parent=0 // pred_check_branch
    %19 = sbr.rel (0) target = $region21
  $region20: #{tpu_custom_call.1} parent=0 // pred_region
    _
  $region21: #{tpu_custom_call.1} parent=0 // pred_fallthru
    _
  %v20 = vld [vmem:[%s1] sm:$0xff]
  %v21 = vld [vmem:[%s1 + $0x8] sm:$0xff]
  %v22 = vld [vmem:[%s1 + $0x10] sm:$0xff]
  %v23 = vld [vmem:[%s1 + $0x18] sm:$0xff]
  %v24 = vld [vmem:[%s1 + $0x20] sm:$0xff]
  %v25 = vld [vmem:[%s0] sm:$0xff]
  %v26 = vld [vmem:[%s0 + $0x8] sm:$0xff]
  %v27 = vld [vmem:[%s0 + $0x10] sm:$0xf]
  %v28 = vld [vmem:[%s3] sm:$0xff]
  %v29 = vld [vmem:[%s3 + $0x8] sm:$0xff]
  %v30 = vld [vmem:[%s3 + $0x10] sm:$0xff]
  %v31 = vld [vmem:[%s3 + $0x18] sm:$0xff]
  %v32 = vld [vmem:[%s3 + $0x20] sm:$0xff]
  %34 = vset.pattern.permute.xlu0 0
  %35 = vperm.xlu0 %34, %v28
  %v36 = vpop.permute.xlu0 %35
  %39 = vset.pattern.permute.xlu0 0
  %40 = vperm.xlu0 %39, %v29
  %v41 = vpop.permute.xlu0 %40
  %44 = vset.pattern.permute.xlu0 0
  %45 = vperm.xlu0 %44, %v30
  %v46 = vpop.permute.xlu0 %45
  %49 = vset.pattern.permute.xlu0 0
  %50 = vperm.xlu0 %49, %v31
  %v51 = vpop.permute.xlu0 %50
  %54 = vset.pattern.permute.xlu0 0
  %55 = vperm.xlu0 %54, %v32
  %v56 = vpop.permute.xlu0 %55
  %vm58 = vcmask 162816
  %v60 = vsel %vm58, %v20, 0
  %v63 = vsel %vm58, %v21, 0
  %v66 = vsel %vm58, %v22, 0
  %v69 = vsel %vm58, %v23, 0
  %v72 = vsel %vm58, %v24, 0
  %vm74 = vcmask 1043456
  %v76 = vsel %vm74, %v27, 0
  %78 = vmatpush.msra.mxu0 0.0
  %79 = vmatpush.msra.mxu0 0.0
  %80 = vmatpush.msra.mxu0 0.0
  %81 = vmatpush.msra.mxu0 0.0
  %82 = vmatpush.msra.mxu0 0.0
  %83 = vmatpush.msra.mxu0 0.0
  %84 = vmatpush.msra.mxu0 0.0
  %85 = vmatpush.msra.mxu0 0.0
  %86 = vmatpush.msra.mxu0 0.0
  %87 = vmatpush.msra.mxu0 0.0
  %88 = vmatpush.msra.mxu0 0.0
  %89 = vmatpush.msra.mxu0 0.0
  %90 = vmatpush.msra.mxu0 0.0
  %91 = vmatpush.msra.mxu0 %v76
  %92 = vmatpush.msra.mxu0 %v26
  %93 = vmatpush.msra.mxu0 %v25
  %94 = vmatmul.f32.gmra.mxu0 %v60
  %v95 = vpop.f32.mrf.mxu0
  %v96 = vadd.f32 %v36, %v95
  %97 = vmatmul.f32.gmra.mxu0 %v63
  %v98 = vpop.f32.mrf.mxu0
  %v99 = vadd.f32 %v41, %v98
  %100 = vmatmul.f32.gmra.mxu0 %v66
  %v101 = vpop.f32.mrf.mxu0
  %v102 = vadd.f32 %v46, %v101
  %103 = vmatmul.f32.gmra.mxu0 %v69
  %v104 = vpop.f32.mrf.mxu0
  %v105 = vadd.f32 %v51, %v104
  %106 = vmatmul.f32.gmra.mxu0 %v72
  %v107 = vpop.f32.mrf.mxu0
  %v108 = vadd.f32 %v56, %v107
  %109 = vdwg.mxu0
  %v110 = vmax.f32 %v96, 0.0
  %v111 = vmax.f32 %v99, 0.0
  %v112 = vmax.f32 %v102, 0.0
  %v113 = vmax.f32 %v105, 0.0
  %v114 = vmax.f32 %v108, 0.0
  %v115 = vld [vmem:[%s2] sm:$0xff]
  %v116 = vld [vmem:[%s2 + $0x8] sm:$0xff]
  %v117 = vld [vmem:[%s2 + $0x10] sm:$0xf]
  %v118 = vld [vmem:[%s4] sm:$0xff]
  %v119 = vld [vmem:[%s4 + $0x8] sm:$0xff]
  %v120 = vld [vmem:[%s4 + $0x10] sm:$0xf]
  %122 = vset.pattern.permute.xlu0 0
  %123 = vperm.xlu0 %122, %v118
  %v124 = vpop.permute.xlu0 %123
  %127 = vset.pattern.permute.xlu0 0
  %128 = vperm.xlu0 %127, %v119
  %v129 = vpop.permute.xlu0 %128
  %132 = vset.pattern.permute.xlu0 0
  %133 = vperm.xlu0 %132, %v120
  %v134 = vpop.permute.xlu0 %133
  %vm136 = vcmask 326656
  %v138 = vsel %vm136, %v115, 0
  %v141 = vsel %vm136, %v116, 0
  %v144 = vsel %vm136, %v117, 0
  %146 = vmatpush.msra.mxu0 0.0
  %147 = vmatpush.msra.mxu0 0.0
  %148 = vmatpush.msra.mxu0 0.0
  %149 = vmatpush.msra.mxu0 0.0
  %150 = vmatpush.msra.mxu0 0.0
  %151 = vmatpush.msra.mxu0 0.0
  %152 = vmatpush.msra.mxu0 0.0
  %153 = vmatpush.msra.mxu0 0.0
  %154 = vmatpush.msra.mxu0 0.0
  %155 = vmatpush.msra.mxu0 0.0
  %156 = vmatpush.msra.mxu0 0.0
  %157 = vmatpush.msra.mxu0 %v114
  %158 = vmatpush.msra.mxu0 %v113
  %159 = vmatpush.msra.mxu0 %v112
  %160 = vmatpush.msra.mxu0 %v111
  %161 = vmatpush.msra.mxu0 %v110
  %162 = vmatmul.f32.gmra.mxu0 %v138
  %v163 = vpop.f32.mrf.mxu0
  %v164 = vadd.f32 %v124, %v163
  %165 = vmatmul.f32.gmra.mxu0 %v141
  %v166 = vpop.f32.mrf.mxu0
  %v167 = vadd.f32 %v129, %v166
  %168 = vmatmul.f32.gmra.mxu0 %v144
  %v169 = vpop.f32.mrf.mxu0
  %v170 = vadd.f32 %v134, %v169
  %171 = vdwg.mxu0
  %vm172 = vcmask 64512
  %173 = vst.msk [vmem:[%s5] sm:$0xff] %vm172, %v164
  %174 = vst.msk [vmem:[%s5 + $0x8] sm:$0xff] %vm172, %v167
  %vm175 = vcmask 60416
  %176 = vst.msk [vmem:[%s5 + $0x10] sm:$0xf] %vm175, %v170
  %177 = vst.msk [vmem:[%s5 + $0x14] sm:$0xff] %vm172, %v110
  %178 = vst.msk [vmem:[%s5 + $0x1c] sm:$0xff] %vm172, %v111
  %179 = vst.msk [vmem:[%s5 + $0x24] sm:$0xff] %vm172, %v112
  %180 = vst.msk [vmem:[%s5 + $0x2c] sm:$0xff] %vm172, %v113
  %181 = vst.msk [vmem:[%s5 + $0x34] sm:$0xff] %vm172, %v114
  // Predicated region
  $region22: #{tpu_custom_call.1} parent=0 // pred_check
    _
  $region23: #{tpu_custom_call.1} parent=0 // pred_check_branch
    %183 = sbr.rel (0) target = $region25
  $region24: #{tpu_custom_call.1} parent=0 // pred_region
    _
  $region25: #{tpu_custom_call.1} parent=0 // pred_fallthru
    _
  // Predicated region
  $region26: #{tpu_custom_call.1} parent=0 // pred_check
    _
  $region27: #{tpu_custom_call.1} parent=0 // pred_check_branch
    %185 = sbr.rel (0) target = $region29
  $region28: #{tpu_custom_call.1} parent=0 // pred_region
    _
  $region29: #{tpu_custom_call.1} parent=0 // pred_fallthru
    _

</llo_original>
